<compile_context>
chip_gen: v7x
topology: tpu7x:2x2x1
jax: 0.10.0
libtpu: 0.0.40
codegen_flags: <defaults>
</compile_context>

<pallas_src>
import numpy as np
import jax
import jax.numpy as jnp
from jax.experimental import pallas as pl
from jax.experimental.pallas import tpu as pltpu


def _gather_kernel(jm_ref, joints_ref, out_ref):
    """Single-shot gather: out[:, m, :] = joints[:, jm[m], :] for all m.

    jm_ref:     (M,)      int32, SMEM  - joint indices (already clamped).
    joints_ref: (B, J, D) VMEM         - full joints tensor, original layout.
    out_ref:    (B, M, D) VMEM         - gathered joints.
    """
    M = out_ref.shape[1]
    # M is known at trace time and small (tens of joints), so a static unroll
    # keeps every store index static; only the load offset `j` is dynamic.
    for m in range(M):
        j = jm_ref[m]  # dynamic scalar read from SMEM
        out_ref[:, pl.ds(m, 1), :] = joints_ref[:, pl.ds(j, 1), :]


def joint_mapper(joints, joint_maps=None):
    """Pallas equivalent of JointMapper.forward.

    joints:     (B, J, D) float array.
    joint_maps: (M,) integer indices into the joint axis, or None (identity).
    returns:    (B, M, D) == torch.index_select(joints, 1, joint_maps).
    """
    if joint_maps is None:
        return joints

    B, J, D = joints.shape
    jm = jnp.asarray(joint_maps, dtype=jnp.int32).reshape(-1)
    M = int(jm.shape[0])
    # Clamp so out-of-range indices can never reach memory (review item).
    jm = jnp.clip(jm, 0, J - 1)

    # Whole-tensor-in-VMEM is fine for realistic joint-mapper sizes
    # (B*J*D*4 bytes is KBs..~1 MB).  For very large batches one would tile
    # the batch axis with a "parallel" grid and keep the same per-tile body.
    return pl.pallas_call(
        _gather_kernel,
        out_shape=jax.ShapeDtypeStruct((B, M, D), joints.dtype),
        in_specs=[
            pl.BlockSpec(memory_space=pltpu.MemorySpace.SMEM),  # joint_maps
            pl.BlockSpec(memory_space=pltpu.MemorySpace.VMEM),  # joints
        ],
        out_specs=pl.BlockSpec(memory_space=pltpu.MemorySpace.VMEM),
    )(jm, joints)


if __name__ == "__main__":
    key = jax.random.PRNGKey(0)

    # Small shapes consistent with the module: batch=2, 16 joints, 3-D coords.
    B, J, D = 2, 16, 3
    joints = jax.random.normal(key, (B, J, D), dtype=jnp.float32)

    # Deterministic joint_maps buffer (subset / reordering of the joints).
    joint_maps = jnp.array([5, 0, 3, 7, 2, 9, 1, 11], dtype=jnp.int32)

    # Case 1: joint_maps provided -> gather along axis 1.
    out = jax.block_until_ready(joint_mapper(joints, joint_maps))
    ref = jnp.take(joints, joint_maps, axis=1)
    np.testing.assert_allclose(np.asarray(out), np.asarray(ref), rtol=0, atol=0)
    assert out.shape == (B, joint_maps.shape[0], D)
    assert out.dtype == joints.dtype

    # Case 2: joint_maps is None -> identity passthrough.
    out_id = jax.block_until_ready(joint_mapper(joints, None))
    np.testing.assert_allclose(np.asarray(out_id), np.asarray(joints))

    print("KERNEL_OK")
</pallas_src>

<mosaic_0001>
module attributes {stable_mosaic.version = 11 : i64} {
  func.func @_gather_kernel(%arg0: memref<8xi32, #tpu.memory_space<smem>>, %arg1: memref<2x16x3xf32, #tpu.memory_space<vmem>>, %arg2: memref<2x8x3xf32, #tpu.memory_space<vmem>>) attributes {dimension_semantics = [], scalar_prefetch = 0 : i64, scratch_operands = 0 : i64, tpu.core_type = #tpu.core_type<tc>} {
    %c0 = arith.constant 0 : index
    %0 = memref.load %arg0[%c0] : memref<8xi32, #tpu.memory_space<smem>>
    %c0_0 = arith.constant 0 : index
    %1 = arith.index_cast %0 : i32 to index
    %c0_1 = arith.constant 0 : index
    %2 = vector.load %arg1[%c0_0, %1, %c0_1] : memref<2x16x3xf32, #tpu.memory_space<vmem>>, vector<2x1x3xf32>
    %c0_2 = arith.constant 0 : index
    %c0_3 = arith.constant 0 : index
    %c0_4 = arith.constant 0 : index
    %3 = vector.load %arg2[%c0_2, %c0_3, %c0_4] : memref<2x8x3xf32, #tpu.memory_space<vmem>>, vector<2x1x3xf32>
    tpu.vector_store %arg2[%c0_2, %c0_3, %c0_4], %2 {strides = array<i32>} : memref<2x8x3xf32, #tpu.memory_space<vmem>>, vector<2x1x3xf32>,
    %c1 = arith.constant 1 : index
    %4 = memref.load %arg0[%c1] : memref<8xi32, #tpu.memory_space<smem>>
    %c0_5 = arith.constant 0 : index
    %5 = arith.index_cast %4 : i32 to index
    %c0_6 = arith.constant 0 : index
    %6 = vector.load %arg1[%c0_5, %5, %c0_6] : memref<2x16x3xf32, #tpu.memory_space<vmem>>, vector<2x1x3xf32>
    %c0_7 = arith.constant 0 : index
    %c1_8 = arith.constant 1 : index
    %c0_9 = arith.constant 0 : index
    %7 = vector.load %arg2[%c0_7, %c1_8, %c0_9] : memref<2x8x3xf32, #tpu.memory_space<vmem>>, vector<2x1x3xf32>
    tpu.vector_store %arg2[%c0_7, %c1_8, %c0_9], %6 {strides = array<i32>} : memref<2x8x3xf32, #tpu.memory_space<vmem>>, vector<2x1x3xf32>,
    %c2 = arith.constant 2 : index
    %8 = memref.load %arg0[%c2] : memref<8xi32, #tpu.memory_space<smem>>
    %c0_10 = arith.constant 0 : index
    %9 = arith.index_cast %8 : i32 to index
    %c0_11 = arith.constant 0 : index
    %10 = vector.load %arg1[%c0_10, %9, %c0_11] : memref<2x16x3xf32, #tpu.memory_space<vmem>>, vector<2x1x3xf32>
    %c0_12 = arith.constant 0 : index
    %c2_13 = arith.constant 2 : index
    %c0_14 = arith.constant 0 : index
    %11 = vector.load %arg2[%c0_12, %c2_13, %c0_14] : memref<2x8x3xf32, #tpu.memory_space<vmem>>, vector<2x1x3xf32>
    tpu.vector_store %arg2[%c0_12, %c2_13, %c0_14], %10 {strides = array<i32>} : memref<2x8x3xf32, #tpu.memory_space<vmem>>, vector<2x1x3xf32>,
    %c3 = arith.constant 3 : index
    %12 = memref.load %arg0[%c3] : memref<8xi32, #tpu.memory_space<smem>>
    %c0_15 = arith.constant 0 : index
    %13 = arith.index_cast %12 : i32 to index
    %c0_16 = arith.constant 0 : index
    %14 = vector.load %arg1[%c0_15, %13, %c0_16] : memref<2x16x3xf32, #tpu.memory_space<vmem>>, vector<2x1x3xf32>
    %c0_17 = arith.constant 0 : index
    %c3_18 = arith.constant 3 : index
    %c0_19 = arith.constant 0 : index
    %15 = vector.load %arg2[%c0_17, %c3_18, %c0_19] : memref<2x8x3xf32, #tpu.memory_space<vmem>>, vector<2x1x3xf32>
    tpu.vector_store %arg2[%c0_17, %c3_18, %c0_19], %14 {strides = array<i32>} : memref<2x8x3xf32, #tpu.memory_space<vmem>>, vector<2x1x3xf32>,
    %c4 = arith.constant 4 : index
    %16 = memref.load %arg0[%c4] : memref<8xi32, #tpu.memory_space<smem>>
    %c0_20 = arith.constant 0 : index
    %17 = arith.index_cast %16 : i32 to index
    %c0_21 = arith.constant 0 : index
    %18 = vector.load %arg1[%c0_20, %17, %c0_21] : memref<2x16x3xf32, #tpu.memory_space<vmem>>, vector<2x1x3xf32>
    %c0_22 = arith.constant 0 : index
    %c4_23 = arith.constant 4 : index
    %c0_24 = arith.constant 0 : index
    %19 = vector.load %arg2[%c0_22, %c4_23, %c0_24] : memref<2x8x3xf32, #tpu.memory_space<vmem>>, vector<2x1x3xf32>
    tpu.vector_store %arg2[%c0_22, %c4_23, %c0_24], %18 {strides = array<i32>} : memref<2x8x3xf32, #tpu.memory_space<vmem>>, vector<2x1x3xf32>,
    %c5 = arith.constant 5 : index
    %20 = memref.load %arg0[%c5] : memref<8xi32, #tpu.memory_space<smem>>
    %c0_25 = arith.constant 0 : index
    %21 = arith.index_cast %20 : i32 to index
    %c0_26 = arith.constant 0 : index
    %22 = vector.load %arg1[%c0_25, %21, %c0_26] : memref<2x16x3xf32, #tpu.memory_space<vmem>>, vector<2x1x3xf32>
    %c0_27 = arith.constant 0 : index
    %c5_28 = arith.constant 5 : index
    %c0_29 = arith.constant 0 : index
    %23 = vector.load %arg2[%c0_27, %c5_28, %c0_29] : memref<2x8x3xf32, #tpu.memory_space<vmem>>, vector<2x1x3xf32>
    tpu.vector_store %arg2[%c0_27, %c5_28, %c0_29], %22 {strides = array<i32>} : memref<2x8x3xf32, #tpu.memory_space<vmem>>, vector<2x1x3xf32>,
    %c6 = arith.constant 6 : index
    %24 = memref.load %arg0[%c6] : memref<8xi32, #tpu.memory_space<smem>>
    %c0_30 = arith.constant 0 : index
    %25 = arith.index_cast %24 : i32 to index
    %c0_31 = arith.constant 0 : index
    %26 = vector.load %arg1[%c0_30, %25, %c0_31] : memref<2x16x3xf32, #tpu.memory_space<vmem>>, vector<2x1x3xf32>
    %c0_32 = arith.constant 0 : index
    %c6_33 = arith.constant 6 : index
    %c0_34 = arith.constant 0 : index
    %27 = vector.load %arg2[%c0_32, %c6_33, %c0_34] : memref<2x8x3xf32, #tpu.memory_space<vmem>>, vector<2x1x3xf32>
    tpu.vector_store %arg2[%c0_32, %c6_33, %c0_34], %26 {strides = array<i32>} : memref<2x8x3xf32, #tpu.memory_space<vmem>>, vector<2x1x3xf32>,
    %c7 = arith.constant 7 : index
    %28 = memref.load %arg0[%c7] : memref<8xi32, #tpu.memory_space<smem>>
    %c0_35 = arith.constant 0 : index
    %29 = arith.index_cast %28 : i32 to index
    %c0_36 = arith.constant 0 : index
    %30 = vector.load %arg1[%c0_35, %29, %c0_36] : memref<2x16x3xf32, #tpu.memory_space<vmem>>, vector<2x1x3xf32>
    %c0_37 = arith.constant 0 : index
    %c7_38 = arith.constant 7 : index
    %c0_39 = arith.constant 0 : index
    %31 = vector.load %arg2[%c0_37, %c7_38, %c0_39] : memref<2x8x3xf32, #tpu.memory_space<vmem>>, vector<2x1x3xf32>
    tpu.vector_store %arg2[%c0_37, %c7_38, %c0_39], %30 {strides = array<i32>} : memref<2x8x3xf32, #tpu.memory_space<vmem>>, vector<2x1x3xf32>,
    return
  }
}

</mosaic_0001>

<llo_original>
// kernel: tpu_custom_call.1
$region0: #{tpu_custom_call.1}
  #allocation0 [shape = 'u32[]', space=smem, size = 0x4, offset = 0x4, fixed_abs, tag = 'smem constant byte address 0x4 - core index']
  #allocation1 [shape = 'u32[144,128]{1,0:T(1,128)}', space=vmem, size = 0x12000, scoped, tag = 'internal scratch']
  %s0 = inlined_call_operand.vmem [shape: s32[8], index: 0, kind: input, shape index: {}]
  %s1 = inlined_call_operand.vmem [shape: f32[2,16,3], index: 1, kind: input, shape index: {}]
  %s2 = inlined_call_operand.vmem [shape: f32[2,8,3], index: 2, kind: output, shape index: {}]
  %s3 = sld [smem:[#allocation0]]
  $region22: #{tpu_custom_call.1} parent=0
    _
  %s5 = ssub.s32 1, %s3
  %s6 = scalar_select 0, %s5, %s3
  $region1: #{tpu_custom_call.1} parent=0
    #allocation2 [shape = 'u8[512]{0}', space=smem, size = 0x200, scoped, tag = 'input window, operand 0, single buffered']
    #allocation3 [shape = 's32[1]{0}', space=sflag, size = 0x4, scoped, tag = 'scoped memory for tpu_custom_call.1']
    %7 = vsyncpa [#allocation3], 0
    // Predicated region
    $region2: #{tpu_custom_call.1} parent=1 // pred_check
      _
    $region3: #{tpu_custom_call.1} parent=1 // pred_check_branch
      %9 = sbr.rel (0) target = $region5
    $region4: #{tpu_custom_call.1} parent=1 // pred_region
      %s11 = ssub.s32 16, 16
      %12 = vsyncadd [#allocation3], %s11
      %s14 = sshll.u32 %s0, 4
      %s15 = int_to_ptr.vmem [resolvable:$true] %s14
      %17 = dma.vmem_to_smem %s15, 16, [#allocation2], [#allocation3]
    $region5: #{tpu_custom_call.1} parent=1 // pred_fallthru
      _
    // Predicated region
    $region6: #{tpu_custom_call.1} parent=1 // pred_check
      _
    $region7: #{tpu_custom_call.1} parent=1 // pred_check_branch
      %19 = sbr.rel (0) target = $region9
    $region8: #{tpu_custom_call.1} parent=1 // pred_region
      _
    $region9: #{tpu_custom_call.1} parent=1 // pred_fallthru
      _
    // Predicated region
    $region10: #{tpu_custom_call.1} parent=1 // pred_check
      _
    $region11: #{tpu_custom_call.1} parent=1 // pred_check_branch
      %21 = sbr.rel (0) target = $region13
    $region12: #{tpu_custom_call.1} parent=1 // pred_region
      %22 = dma.done [#allocation3], 16
    $region13: #{tpu_custom_call.1} parent=1 // pred_fallthru
      _
    %23 = sfence
    %s24 = sld [smem:[#allocation2]]
    %s25 = scalar_lea.vmem %s1, %s24
    %v26 = vld [vmem:[%s25] sm:$0x1]
    %v27 = vld [vmem:[%s25 + $0x10] sm:$0x1]
    %vm28 = vcmask 16384
    %29 = vst.msk [vmem:[%s2] sm:$0x1] %vm28, %v26
    %30 = vst.msk [vmem:[%s2 + $0x8] sm:$0x1] %vm28, %v27
    %s31 = sld [smem:[#allocation2 + $0x1]]
    %s32 = scalar_lea.vmem %s1, %s31
    %v33 = vld [vmem:[%s32] sm:$0x1]
    %v34 = vld [vmem:[%s32 + $0x10] sm:$0x1]
    %35 = vst.msk [vmem:[%s2 + $0x1] sm:$0x1] %vm28, %v33
    %36 = vst.msk [vmem:[%s2 + $0x9] sm:$0x1] %vm28, %v34
    %s37 = sld [smem:[#allocation2 + $0x2]]
    %s38 = scalar_lea.vmem %s1, %s37
    %v39 = vld [vmem:[%s38] sm:$0x1]
    %v40 = vld [vmem:[%s38 + $0x10] sm:$0x1]
    %41 = vst.msk [vmem:[%s2 + $0x2] sm:$0x1] %vm28, %v39
    %42 = vst.msk [vmem:[%s2 + $0xa] sm:$0x1] %vm28, %v40
    %s43 = sld [smem:[#allocation2 + $0x3]]
    %s44 = scalar_lea.vmem %s1, %s43
    %v45 = vld [vmem:[%s44] sm:$0x1]
    %v46 = vld [vmem:[%s44 + $0x10] sm:$0x1]
    %47 = vst.msk [vmem:[%s2 + $0x3] sm:$0x1] %vm28, %v45
    %48 = vst.msk [vmem:[%s2 + $0xb] sm:$0x1] %vm28, %v46
    %s49 = sld [smem:[#allocation2 + $0x4]]
    %s50 = scalar_lea.vmem %s1, %s49
    %v51 = vld [vmem:[%s50] sm:$0x1]
    %v52 = vld [vmem:[%s50 + $0x10] sm:$0x1]
    %53 = vst.msk [vmem:[%s2 + $0x4] sm:$0x1] %vm28, %v51
    %54 = vst.msk [vmem:[%s2 + $0xc] sm:$0x1] %vm28, %v52
    %s55 = sld [smem:[#allocation2 + $0x5]]
    %s56 = scalar_lea.vmem %s1, %s55
    %v57 = vld [vmem:[%s56] sm:$0x1]
    %v58 = vld [vmem:[%s56 + $0x10] sm:$0x1]
    %59 = vst.msk [vmem:[%s2 + $0x5] sm:$0x1] %vm28, %v57
    %60 = vst.msk [vmem:[%s2 + $0xd] sm:$0x1] %vm28, %v58
    %s61 = sld [smem:[#allocation2 + $0x6]]
    %s62 = scalar_lea.vmem %s1, %s61
    %v63 = vld [vmem:[%s62] sm:$0x1]
    %v64 = vld [vmem:[%s62 + $0x10] sm:$0x1]
    %65 = vst.msk [vmem:[%s2 + $0x6] sm:$0x1] %vm28, %v63
    %66 = vst.msk [vmem:[%s2 + $0xe] sm:$0x1] %vm28, %v64
    %s67 = sld [smem:[#allocation2 + $0x7]]
    %s68 = scalar_lea.vmem %s1, %s67
    %v69 = vld [vmem:[%s68] sm:$0x1]
    %v70 = vld [vmem:[%s68 + $0x10] sm:$0x1]
    %71 = vst.msk [vmem:[%s2 + $0x7] sm:$0x1] %vm28, %v69
    %72 = vst.msk [vmem:[%s2 + $0xf] sm:$0x1] %vm28, %v70
    // Predicated region
    $region14: #{tpu_custom_call.1} parent=1 // pred_check
      _
    $region15: #{tpu_custom_call.1} parent=1 // pred_check_branch
      %74 = sbr.rel (0) target = $region17
    $region16: #{tpu_custom_call.1} parent=1 // pred_region
      _
    $region17: #{tpu_custom_call.1} parent=1 // pred_fallthru
      _
    // Predicated region
    $region18: #{tpu_custom_call.1} parent=1 // pred_check
      _
    $region19: #{tpu_custom_call.1} parent=1 // pred_check_branch
      %76 = sbr.rel (0) target = $region21
    $region20: #{tpu_custom_call.1} parent=1 // pred_region
      _
    $region21: #{tpu_custom_call.1} parent=1 // pred_fallthru
      _
    %77 = vsyncpa [#allocation3], 1

</llo_original>
